<compile_context>
chip_gen: v5e
topology: v5e:2x2
jax: 0.10.0
libtpu: 0.0.40
codegen_flags: <defaults>
</compile_context>

<pallas_src>
import functools

import jax
import jax.numpy as jnp
import numpy as np
from jax import lax
from jax.experimental import pallas as pl
from jax.experimental.pallas import tpu as pltpu


def _round_up(x: int, m: int) -> int:
    return (x + m - 1) // m * m


def _cdiv(a: int, b: int) -> int:
    return -(-a // b)


# ---------------------------------------------------------------------------
# Stage 1: per-node pre-MLP + per-graph sum pooling into partial aggregates.
# ---------------------------------------------------------------------------
def _node_pool_kernel(x_ref, bounds_ref, w1_ref, b1_ref, w2_ref, b2_ref,
                      part_ref, *, n_valid_nodes, sub_rows, tiles_per_split):
    p = pl.program_id(0)            # TensorCore split ("parallel")
    t = pl.program_id(1)            # node-tile index within the split ("arbitrary")

    @pl.when(t == 0)
    def _():
        part_ref[...] = jnp.zeros_like(part_ref)

    tile_rows = x_ref.shape[0]
    n_sub = tile_rows // sub_rows
    n_graphs_p = part_ref.shape[0]
    # Global row offset of this tile, *unclamped*: duplicate tiles past the end
    # of the node array get offsets >= n_valid_nodes and are fully masked below.
    tile_row0 = (p * tiles_per_split + t) * tile_rows

    starts = bounds_ref[:, 0:1]     # (Bp, 1) int32: first node row of each graph
    ends = bounds_ref[:, 1:2]       # (Bp, 1) int32: one-past-last node row

    @pl.loop(0, n_sub)
    def _(s):
        row0 = pl.multiple_of(s * sub_rows, sub_rows)
        grow0 = tile_row0 + row0

        # Ragged-tail / duplicate-tile masking: zero invalid rows *before* any
        # arithmetic so stale VMEM garbage never propagates (0 * NaN hazard).
        x = x_ref[pl.ds(row0, sub_rows), :]                           # (SUB, D) f32
        row_col = grow0 + lax.broadcasted_iota(jnp.int32, (sub_rows, 1), 0)
        x = jnp.where(row_col < n_valid_nodes, x, 0.0)

        # pre-MLP: Linear -> ReLU -> Linear (in-kernel cast, f32 accumulation).
        xc = x.astype(w1_ref.dtype)
        h1 = jnp.dot(xc, w1_ref[...],
                     preferred_element_type=jnp.float32) + b1_ref[...]
        h1 = jnp.maximum(h1, 0.0)
        pre = jnp.dot(h1.astype(w2_ref.dtype), w2_ref[...],
                      preferred_element_type=jnp.float32) + b2_ref[...]   # (SUB, Dp)

        # Per-graph sum pooling: graphs are contiguous node-row ranges, so the
        # (Bp, SUB) one-hot is a [start, end) range compare on the global row
        # index (pure VPU work; no dense segment matrix, no lane-dim slicing).
        row_lane = grow0 + lax.broadcasted_iota(
            jnp.int32, (n_graphs_p, sub_rows), 1)
        onehot = jnp.logical_and(row_lane >= starts,
                                 row_lane < ends).astype(jnp.float32)
        part_ref[...] += jnp.dot(onehot, pre,
                                 preferred_element_type=jnp.float32)


# ---------------------------------------------------------------------------
# Stage 2: sum the per-split partial aggregates and run the post-MLP.
# ---------------------------------------------------------------------------
def _post_mlp_kernel(part_ref, w3_ref, b3_ref, w4_ref, b4_ref, out_ref):
    agg = jnp.sum(part_ref[...], axis=0)                              # (Bp, Dp) f32
    h = jnp.dot(agg, w3_ref[...],
                preferred_element_type=jnp.float32) + b3_ref[...]
    h = jnp.maximum(h, 0.0)
    out = jnp.dot(h, w4_ref[...],
                  preferred_element_type=jnp.float32) + b4_ref[...]
    out_ref[...] = out.astype(out_ref.dtype)


# ---------------------------------------------------------------------------
# Parameter init / one-time layout prep
# ---------------------------------------------------------------------------
def init_readout_params(key, input_size: int, output_size: int):
    """Deterministic synthetic init mimicking nn.Linear shapes (weight: (out, in))."""
    ks = jax.random.split(key, 8)

    def lin(kw, kb, fan_in, fan_out):
        bound = 1.0 / np.sqrt(fan_in)
        w = jax.random.uniform(kw, (fan_out, fan_in), jnp.float32, -bound, bound)
        b = jax.random.uniform(kb, (fan_out,), jnp.float32, -bound, bound)
        return w, b

    w1, b1 = lin(ks[0], ks[1], input_size, input_size)    # pre[0]
    w2, b2 = lin(ks[2], ks[3], input_size, input_size)    # pre[2]
    w3, b3 = lin(ks[4], ks[5], input_size, input_size)    # post[0]
    w4, b4 = lin(ks[6], ks[7], input_size, output_size)   # post[2]
    return (w1, b1, w2, b2, w3, b3, w4, b4)


def prepare_readout_params(params, *, lane_pad: int = 128, pre_dtype=jnp.bfloat16):
    """One-time layout prep: transpose to (in, out), zero-pad hidden/output dims
    to a lane-dense width, cast the bandwidth-heavy pre-MLP weights to bf16
    (pass pre_dtype=jnp.float32 for an exact-f32 pre-MLP)."""
    w1, b1, w2, b2, w3, b3, w4, b4 = params
    D = w1.shape[1]
    O = w4.shape[0]
    Dp = _round_up(max(D, lane_pad), 128)
    Op = _round_up(max(O, lane_pad), 128)

    def pad_t(w, rows, cols, dtype):       # (out, in) -> (in, out), zero-padded
        wt = w.T
        wt = jnp.pad(wt, ((0, rows - wt.shape[0]), (0, cols - wt.shape[1])))
        return wt.astype(dtype)

    def pad_b(b, cols):
        return jnp.pad(b, (0, cols - b.shape[0]))[None, :].astype(jnp.float32)

    return dict(
        w1t=pad_t(w1, D, Dp, pre_dtype),    b1=pad_b(b1, Dp),
        w2t=pad_t(w2, Dp, Dp, pre_dtype),   b2=pad_b(b2, Dp),
        w3t=pad_t(w3, Dp, Dp, jnp.float32), b3=pad_b(b3, Dp),
        w4t=pad_t(w4, Dp, Op, jnp.float32), b4=pad_b(b4, Op),
        D=D, O=O, Dp=Dp, Op=Op,
    )


def make_graph_bounds(batch_num_objects, n_graphs_padded: int):
    """(Bp, 2) int32 [start, end) node-row range per graph.  Tiny; cacheable per
    batch layout by the caller (pass via readout_forward(graph_bounds=...))."""
    counts = np.asarray(batch_num_objects, dtype=np.int64)
    ends = np.cumsum(counts)
    starts = ends - counts
    bounds = np.zeros((n_graphs_padded, 2), dtype=np.int32)  # padded graphs: empty
    bounds[:counts.shape[0], 0] = starts
    bounds[:counts.shape[0], 1] = ends
    return jnp.asarray(bounds)


# ---------------------------------------------------------------------------
# Forward wrapper
# ---------------------------------------------------------------------------
def readout_forward(batch_num_objects, node_states, prepared, *,
                    node_tile: int = 8192, sub_tile: int = 512,
                    num_splits: int = 2, graph_bounds=None):
    """batch_num_objects: static python list of ints; node_states: (N, D) f32."""
    N, D = node_states.shape
    assert D == prepared["D"]
    assert int(sum(batch_num_objects)) == N
    B = len(batch_num_objects)
    O, Dp, Op = prepared["O"], prepared["Dp"], prepared["Op"]
    Bp = _round_up(max(B, 8), 8)

    if graph_bounds is None:
        graph_bounds = make_graph_bounds(batch_num_objects, Bp)

    if N == 0:
        # Empty node set: aggregate is all-zero; still run the post-MLP.
        partials = jnp.zeros((1, Bp, Dp), jnp.float32)
    else:
        # --- node-axis tile plan (all static python ints) -------------------
        SUB = min(sub_tile, _round_up(N, 8))                  # f32 compute sub-tile
        TN = _round_up(min(node_tile, _round_up(N, SUB)), SUB)  # DMA tile (rows)
        num_tiles = _cdiv(N, TN)
        P = num_splits if num_tiles >= num_splits else 1      # TC splits (v7x)
        Tps = _cdiv(num_tiles, P)
        total_tiles = P * Tps                                  # may exceed by < P

        if total_tiles == num_tiles:
            x_map = lambda p, t: (p * Tps + t, 0)
        else:
            last = num_tiles - 1
            # Duplicate trailing tiles re-read the last in-bounds tile; their
            # rows are >= N so the in-kernel mask zeroes them out.
            x_map = lambda p, t: (jnp.minimum(p * Tps + t, last), 0)
        const = lambda p, t: (0, 0)

        kernel = functools.partial(_node_pool_kernel, n_valid_nodes=N,
                                   sub_rows=SUB, tiles_per_split=Tps)

        w_isz = np.dtype(prepared["w1t"].dtype).itemsize
        x_isz = np.dtype(node_states.dtype).itemsize
        rows_proc = total_tiles * TN
        flops = rows_proc * (2 * D * Dp + 2 * Dp * Dp + 2 * Bp * Dp)
        bytes_accessed = (N * D * x_isz + Bp * 2 * 4
                          + (D * Dp + Dp * Dp) * w_isz + 2 * Dp * 4
                          + P * Bp * Dp * 4)
        # Scale the VMEM budget with the tile plan; cap at 48 MiB so the same
        # settings still fit v7x's 64 MiB physical VMEM (v5e/v6e have 128 MiB).
        vmem_limit = min(
            48 * 1024 * 1024,
            max(16 * 1024 * 1024,
                2 * TN * D * x_isz              # double-buffered node tile
                + 8 * SUB * Dp * 4              # f32 intermediates (headroom)
                + 2 * (D + Dp + 2) * Dp * w_isz  # resident weights/biases
                + 2 * Bp * Dp * 4
                + 2 * 1024 * 1024))

        partials = pl.pallas_call(
            kernel,
            out_shape=jax.ShapeDtypeStruct((P, Bp, Dp), jnp.float32),
            grid=(P, Tps),
            in_specs=[
                # Streamed node tile (f32, native layout).  If xprof ever shows
                # exposed DMA here, add pipeline_mode=pl.Buffered(3).
                pl.BlockSpec((TN, D), x_map),
                pl.BlockSpec((Bp, 2), const),     # graph [start, end) bounds
                pl.BlockSpec((D, Dp), const),     # w1 (pre_dtype)
                pl.BlockSpec((1, Dp), const),     # b1 (f32)
                pl.BlockSpec((Dp, Dp), const),    # w2 (pre_dtype)
                pl.BlockSpec((1, Dp), const),     # b2 (f32)
            ],
            out_specs=pl.BlockSpec((None, Bp, Dp), lambda p, t: (p, 0, 0)),
            compiler_params=pltpu.CompilerParams(
                dimension_semantics=("parallel", "arbitrary"),
                vmem_limit_bytes=vmem_limit),
            cost_estimate=pl.CostEstimate(flops=flops, transcendentals=0,
                                          bytes_accessed=bytes_accessed),
        )(node_states, graph_bounds,
          prepared["w1t"], prepared["b1"], prepared["w2t"], prepared["b2"])

    # Tiny graph-level kernel: sum per-split partials + post-MLP (no grid,
    # everything fits in VMEM).
    out = pl.pallas_call(
        _post_mlp_kernel,
        out_shape=jax.ShapeDtypeStruct((Bp, Op), jnp.float32),
    )(partials, prepared["w3t"], prepared["b3"], prepared["w4t"], prepared["b4"])

    return out[:B, :O]


# ---------------------------------------------------------------------------
# Pure-JAX reference mirroring the PyTorch forward (cumsum + index_select).
# ---------------------------------------------------------------------------
def readout_reference(batch_num_objects, node_states, params, pre_dtype=jnp.float32):
    w1, b1, w2, b2, w3, b3, w4, b4 = params
    x = node_states.astype(pre_dtype)
    h1 = jnp.maximum(
        jnp.dot(x, w1.T.astype(pre_dtype),
                preferred_element_type=jnp.float32) + b1, 0.0)
    pre = jnp.dot(h1.astype(pre_dtype), w2.T.astype(pre_dtype),
                  preferred_element_type=jnp.float32) + b2
    cumsum_indices = jnp.cumsum(jnp.asarray(batch_num_objects)) - 1
    cs = jnp.cumsum(pre, axis=0)[cumsum_indices]
    agg = jnp.concatenate([cs[0:1], cs[1:] - cs[:-1]], axis=0)
    return jnp.maximum(agg @ w3.T + b3, 0.0) @ w4.T + b4


if __name__ == "__main__":
    input_size = 32
    output_size = 16

    key = jax.random.PRNGKey(0)
    k_x1, k_x2, k_p = jax.random.split(key, 3)
    params = init_readout_params(k_p, input_size, output_size)
    prepared = prepare_readout_params(params)

    # Case 1: tiny batch (2 graphs, 8 nodes) -> single tile, single split.
    bno_small = [3, 5]
    x_small = jax.random.normal(k_x1, (sum(bno_small), input_size), jnp.float32)
    out_small = jax.block_until_ready(readout_forward(bno_small, x_small, prepared))
    assert out_small.shape == (len(bno_small), output_size)

    ref_bf16 = readout_reference(bno_small, x_small, params, pre_dtype=jnp.bfloat16)
    np.testing.assert_allclose(np.asarray(out_small), np.asarray(ref_bf16),
                               rtol=2e-3, atol=2e-3)
    ref_f32 = readout_reference(bno_small, x_small, params)
    np.testing.assert_allclose(np.asarray(out_small), np.asarray(ref_f32),
                               rtol=5e-2, atol=5e-2)

    # Case 2: multi-tile / dual-split path (5 graphs, 1300 nodes) with a ragged
    # last tile and a clamped duplicate tile -> exercises the in-kernel masking,
    # the inner sub-tile loop and the parallel partial aggregates.
    bno_big = [211, 340, 129, 400, 220]
    x_big = jax.random.normal(k_x2, (sum(bno_big), input_size), jnp.float32)
    out_big = jax.block_until_ready(
        readout_forward(bno_big, x_big, prepared,
                        node_tile=512, sub_tile=128, num_splits=2))
    assert out_big.shape == (len(bno_big), output_size)
    ref_big = readout_reference(bno_big, x_big, params, pre_dtype=jnp.bfloat16)
    np.testing.assert_allclose(np.asarray(out_big), np.asarray(ref_big),
                               rtol=1e-2, atol=1e-2)

    print("KERNEL_OK")
</pallas_src>

<mosaic_0001>
module attributes {stable_mosaic.version = 11 : i64} {
  func.func @_node_pool_kernel(%arg0: i32, %arg1: i32, %arg2: memref<8x32xf32, #tpu.memory_space<vmem>>, %arg3: memref<8x2xi32, #tpu.memory_space<vmem>>, %arg4: memref<32x128xbf16, #tpu.memory_space<vmem>>, %arg5: memref<1x128xf32, #tpu.memory_space<vmem>>, %arg6: memref<128x128xbf16, #tpu.memory_space<vmem>>, %arg7: memref<1x128xf32, #tpu.memory_space<vmem>>, %arg8: memref<1x8x128xf32, #tpu.memory_space<vmem>>) attributes {dimension_semantics = [#tpu.dimension_semantics<parallel>, #tpu.dimension_semantics<arbitrary>], iteration_bounds = array<i64: 1, 1>, scalar_prefetch = 0 : i64, scratch_operands = 0 : i64, tpu.core_type = #tpu.core_type<tc>, window_params = [{transform_indices = @transform_0, window_bounds = array<i64: 8, 32>}, {pipeline_mode = #tpu.pipeline_mode<synchronous>, transform_indices = @transform_1, window_bounds = array<i64: 8, 2>}, {pipeline_mode = #tpu.pipeline_mode<synchronous>, transform_indices = @transform_2, window_bounds = array<i64: 32, 128>}, {pipeline_mode = #tpu.pipeline_mode<synchronous>, transform_indices = @transform_3, window_bounds = array<i64: 1, 128>}, {pipeline_mode = #tpu.pipeline_mode<synchronous>, transform_indices = @transform_4, window_bounds = array<i64: 128, 128>}, {pipeline_mode = #tpu.pipeline_mode<synchronous>, transform_indices = @transform_5, window_bounds = array<i64: 1, 128>}, {transform_indices = @transform_6, window_bounds = array<i64: 1, 8, 128>}]} {
    %c0_i32 = arith.constant 0 : i32
    %0 = arith.cmpi eq, %arg1, %c0_i32 : i32
    %1 = arith.extui %0 : i1 to i32
    %c0_i32_0 = arith.constant 0 : i32
    %2 = arith.cmpi ne, %1, %c0_i32_0 : i32
    scf.if %2 {
      %cst_28 = arith.constant 0.000000e+00 : f32
      %55 = vector.broadcast %cst_28 : f32 to vector<8x128xf32>
      %c0_29 = arith.constant 0 : index
      %c0_30 = arith.constant 0 : index
      %c0_31 = arith.constant 0 : index
      %56 = vector.load %arg8[%c0_29, %c0_30, %c0_31] : memref<1x8x128xf32, #tpu.memory_space<vmem>>, vector<1x8x128xf32>
      %57 = vector.shape_cast %56 : vector<1x8x128xf32> to vector<8x128xf32>
      %58 = vector.shape_cast %55 : vector<8x128xf32> to vector<1x8x128xf32>
      tpu.vector_store %arg8[%c0_29, %c0_30, %c0_31], %58 {strides = array<i32>} : memref<1x8x128xf32, #tpu.memory_space<vmem>>, vector<1x8x128xf32>,
    } else {
    }
    %c1_i32 = arith.constant 1 : i32
    %3 = arith.muli %arg0, %c1_i32 : i32
    %4 = arith.addi %3, %arg1 : i32
    %c8_i32 = arith.constant 8 : i32
    %5 = arith.muli %4, %c8_i32 : i32
    %c0 = arith.constant 0 : index
    %c0_1 = arith.constant 0 : index
    %6 = vector.load %arg3[%c0, %c0_1] : memref<8x2xi32, #tpu.memory_space<vmem>>, vector<8x1xi32>
    %c0_2 = arith.constant 0 : index
    %c1 = arith.constant 1 : index
    %7 = vector.load %arg3[%c0_2, %c1] : memref<8x2xi32, #tpu.memory_space<vmem>>, vector<8x1xi32>
    %c0_i32_3 = arith.constant 0 : i32
    %c1_i32_4 = arith.constant 1 : i32
    %8 = arith.muli %c0_i32_3, %c1_i32_4 : i32
    %c0_i32_5 = arith.constant 0 : i32
    %9 = arith.addi %c0_i32_5, %8 : i32
    %c8_i32_6 = arith.constant 8 : i32
    %10 = arith.muli %9, %c8_i32_6 : i32
    %11 = tpu.assume_multiple %10, 8 : i32
    %12 = arith.addi %5, %11 : i32
    %13 = arith.index_cast %11 : i32 to index
    %c0_7 = arith.constant 0 : index
    %14 = vector.load %arg2[%13, %c0_7] : memref<8x32xf32, #tpu.memory_space<vmem>>, vector<8x32xf32>
    %15 = tpu.iota {dimensions = array<i32: 0>} : vector<8x1xi32>
    %16 = vector.broadcast %12 : i32 to vector<8x1xi32>
    %17 = arith.addi %16, %15 : vector<8x1xi32>
    %c8_i32_8 = arith.constant 8 : i32
    %18 = vector.broadcast %c8_i32_8 : i32 to vector<8x1xi32>
    %19 = arith.cmpi slt, %17, %18 : vector<8x1xi32>
    %cst = arith.constant 0.000000e+00 : f32
    %20 = vector.shape_cast %19 : vector<8x1xi1> to vector<8x1xi1>
    %21 = vector.broadcast %20 : vector<8x1xi1> to vector<8x32xi1>
    %22 = vector.broadcast %cst : f32 to vector<8x32xf32>
    %23 = arith.select %21, %14, %22 : vector<8x32xi1>, vector<8x32xf32>
    %24 = arith.truncf %23 : vector<8x32xf32> to vector<8x32xbf16>
    %c0_9 = arith.constant 0 : index
    %c0_10 = arith.constant 0 : index
    %25 = vector.load %arg4[%c0_9, %c0_10] : memref<32x128xbf16, #tpu.memory_space<vmem>>, vector<32x128xbf16>
    %cst_11 = arith.constant dense<0.000000e+00> : vector<8x128xf32>
    %26 = tpu.matmul %24, %25, %cst_11 {dimension_numbers = #tpu.dot_dimension_numbers<[1], [0], [0], [1], [0, 0, 1, 1], [], []>} : vector<8x32xbf16>, vector<32x128xbf16>, vector<8x128xf32> -> vector<8x128xf32>
    %c0_12 = arith.constant 0 : index
    %c0_13 = arith.constant 0 : index
    %27 = vector.load %arg5[%c0_12, %c0_13] : memref<1x128xf32, #tpu.memory_space<vmem>>, vector<1x128xf32>
    %28 = vector.broadcast %27 : vector<1x128xf32> to vector<8x128xf32>
    %29 = arith.addf %26, %28 : vector<8x128xf32>
    %cst_14 = arith.constant 0.000000e+00 : f32
    %30 = vector.broadcast %cst_14 : f32 to vector<8x128xf32>
    %31 = arith.maximumf %29, %30 : vector<8x128xf32>
    %32 = arith.truncf %31 : vector<8x128xf32> to vector<8x128xbf16>
    %c0_15 = arith.constant 0 : index
    %c0_16 = arith.constant 0 : index
    %33 = vector.load %arg6[%c0_15, %c0_16] : memref<128x128xbf16, #tpu.memory_space<vmem>>, vector<128x128xbf16>
    %cst_17 = arith.constant dense<0.000000e+00> : vector<8x128xf32>
    %34 = tpu.matmul %32, %33, %cst_17 {dimension_numbers = #tpu.dot_dimension_numbers<[1], [0], [0], [1], [0, 0, 1, 1], [], []>} : vector<8x128xbf16>, vector<128x128xbf16>, vector<8x128xf32> -> vector<8x128xf32>
    %c0_18 = arith.constant 0 : index
    %c0_19 = arith.constant 0 : index
    %35 = vector.load %arg7[%c0_18, %c0_19] : memref<1x128xf32, #tpu.memory_space<vmem>>, vector<1x128xf32>
    %36 = vector.broadcast %35 : vector<1x128xf32> to vector<8x128xf32>
    %37 = arith.addf %34, %36 : vector<8x128xf32>
    %38 = tpu.iota {dimensions = array<i32: 1>} : vector<8x8xi32>
    %39 = vector.broadcast %12 : i32 to vector<8x8xi32>
    %40 = arith.addi %39, %38 : vector<8x8xi32>
    %41 = vector.broadcast %6 : vector<8x1xi32> to vector<8x8xi32>
    %42 = arith.cmpi sge, %40, %41 : vector<8x8xi32>
    %43 = vector.broadcast %7 : vector<8x1xi32> to vector<8x8xi32>
    %44 = arith.cmpi slt, %40, %43 : vector<8x8xi32>
    %45 = arith.andi %42, %44 : vector<8x8xi1>
    %46 = arith.extui %45 : vector<8x8xi1> to vector<8x8xi32>
    %47 = arith.sitofp %46 : vector<8x8xi32> to vector<8x8xf32>
    %c0_20 = arith.constant 0 : index
    %c0_21 = arith.constant 0 : index
    %c0_22 = arith.constant 0 : index
    %48 = vector.load %arg8[%c0_20, %c0_21, %c0_22] : memref<1x8x128xf32, #tpu.memory_space<vmem>>, vector<1x8x128xf32>
    %49 = vector.shape_cast %48 : vector<1x8x128xf32> to vector<8x128xf32>
    %cst_23 = arith.constant dense<0.000000e+00> : vector<8x128xf32>
    %50 = tpu.matmul %47, %37, %cst_23 {dimension_numbers = #tpu.dot_dimension_numbers<[1], [0], [0], [1], [0, 0, 1, 1], [], []>} : vector<8x8xf32>, vector<8x128xf32>, vector<8x128xf32> -> vector<8x128xf32>
    %51 = arith.addf %49, %50 : vector<8x128xf32>
    %c0_24 = arith.constant 0 : index
    %c0_25 = arith.constant 0 : index
    %c0_26 = arith.constant 0 : index
    %52 = vector.load %arg8[%c0_24, %c0_25, %c0_26] : memref<1x8x128xf32, #tpu.memory_space<vmem>>, vector<1x8x128xf32>
    %53 = vector.shape_cast %52 : vector<1x8x128xf32> to vector<8x128xf32>
    %54 = vector.shape_cast %51 : vector<8x128xf32> to vector<1x8x128xf32>
    tpu.vector_store %arg8[%c0_24, %c0_25, %c0_26], %54 {strides = array<i32>} : memref<1x8x128xf32, #tpu.memory_space<vmem>>, vector<1x8x128xf32>,
    %c1_i32_27 = arith.constant 1 : i32
    return
  }
  func.func @transform_0(%arg0: i32, %arg1: i32) -> (i32, i32) {
    %c1_i32 = arith.constant 1 : i32
    %0 = arith.muli %arg0, %c1_i32 : i32
    %1 = arith.addi %0, %arg1 : i32
    %c0_i32 = arith.constant 0 : i32
    %c0_i32_0 = arith.constant 0 : i32
    return %1, %c0_i32 : i32, i32
  }
  func.func @transform_1(%arg0: i32, %arg1: i32) -> (i32, i32) {
    %c0_i32 = arith.constant 0 : i32
    %c0_i32_0 = arith.constant 0 : i32
    %c0_i32_1 = arith.constant 0 : i32
    return %c0_i32, %c0_i32_0 : i32, i32
  }
  func.func @transform_2(%arg0: i32, %arg1: i32) -> (i32, i32) {
    %c0_i32 = arith.constant 0 : i32
    %c0_i32_0 = arith.constant 0 : i32
    %c0_i32_1 = arith.constant 0 : i32
    return %c0_i32, %c0_i32_0 : i32, i32
  }
  func.func @transform_3(%arg0: i32, %arg1: i32) -> (i32, i32) {
    %c0_i32 = arith.constant 0 : i32
    %c0_i32_0 = arith.constant 0 : i32
    %c0_i32_1 = arith.constant 0 : i32
    return %c0_i32, %c0_i32_0 : i32, i32
  }
  func.func @transform_4(%arg0: i32, %arg1: i32) -> (i32, i32) {
    %c0_i32 = arith.constant 0 : i32
    %c0_i32_0 = arith.constant 0 : i32
    %c0_i32_1 = arith.constant 0 : i32
    return %c0_i32, %c0_i32_0 : i32, i32
  }
  func.func @transform_5(%arg0: i32, %arg1: i32) -> (i32, i32) {
    %c0_i32 = arith.constant 0 : i32
    %c0_i32_0 = arith.constant 0 : i32
    %c0_i32_1 = arith.constant 0 : i32
    return %c0_i32, %c0_i32_0 : i32, i32
  }
  func.func @transform_6(%arg0: i32, %arg1: i32) -> (i32, i32, i32) {
    %c0_i32 = arith.constant 0 : i32
    %c0_i32_0 = arith.constant 0 : i32
    %c0_i32_1 = arith.constant 0 : i32
    return %arg0, %c0_i32, %c0_i32_0 : i32, i32, i32
  }
}

</mosaic_0001>

<llo_original>
// kernel: tpu_custom_call.1
$region0: #{tpu_custom_call.1}
  #allocation0 [shape = 'u32[]', space=smem, size = 0x4, offset = 0x4, fixed_abs, tag = 'smem constant byte address 0x4 - core index']
  #allocation1 [shape = 'u32[72,128]{1,0:T(1,128)}', space=vmem, size = 0x9000, scoped, tag = 'internal scratch']
  %s0 = inlined_call_operand.vmem [shape: f32[8,32], index: 0, kind: input, shape index: {}]
  %s1 = inlined_call_operand.vmem [shape: s32[8,2], index: 1, kind: input, shape index: {}]
  %s2 = inlined_call_operand.hbm [shape: bf16[32,128], index: 2, kind: input, shape index: {}]
  %s3 = inlined_call_operand.vmem [shape: f32[1,128], index: 3, kind: input, shape index: {}]
  %s4 = inlined_call_operand.hbm [shape: bf16[128,128], index: 4, kind: input, shape index: {}]
  %s5 = inlined_call_operand.vmem [shape: f32[1,128], index: 5, kind: input, shape index: {}]
  %s6 = inlined_call_operand.hbm [shape: f32[1,8,128], index: 6, kind: output, shape index: {}]
  %s7 = sld [smem:[#allocation0]]
  $region46: #{tpu_custom_call.1} parent=0
    _
  %s9 = ssub.s32 1, %s7
  %s10 = scalar_select 0, %s9, %s7
  $region1: #{tpu_custom_call.1} parent=0
    #allocation2 [shape = 'u8[8192]{0}', space=vmem, size = 0x2000, scoped, tag = 'input window, operand 2, single buffered']
    #allocation3 [shape = 's32[1]{0}', space=sflag, size = 0x4, scoped, tag = 'scoped memory for tpu_custom_call.1']
    #allocation4 [shape = 's32[1]{0}', space=sflag, size = 0x4, scoped, tag = 'scoped memory for tpu_custom_call.1']
    #allocation5 [shape = 'u8[32768]{0}', space=vmem, size = 0x8000, scoped, tag = 'input window, operand 4, single buffered']
    #allocation6 [shape = 's32[1]{0}', space=sflag, size = 0x4, scoped, tag = 'scoped memory for tpu_custom_call.1']
    #allocation7 [shape = 'u8[4096]{0}', space=vmem, size = 0x1000, scoped, tag = 'output window, operand 0, single buffered']
    %11 = vsyncpa [#allocation3], 0
    %12 = vsyncpa [#allocation6], 0
    %13 = vsyncpa [#allocation4], 0
    // Predicated region
    $region2: #{tpu_custom_call.1} parent=1 // pred_check
      _
    $region3: #{tpu_custom_call.1} parent=1 // pred_check_branch
      %15 = sbr.rel (0) target = $region5
    $region4: #{tpu_custom_call.1} parent=1 // pred_region
      %s16 = sadd.s32 0, 0
      %p17 = scmp.lt.s32.totalorder %s16, 0
      %s18 = scalar_select %p17, %s16, 0
      %s19 = smul.addr %s18, 8
      %s20 = scalar_lea.vmem %s0, %s19
      %s21 = sadd.s32 0, 0
    $region5: #{tpu_custom_call.1} parent=1 // pred_fallthru
      _
    // Predicated region
    $region6: #{tpu_custom_call.1} parent=1 // pred_check
      _
    $region7: #{tpu_custom_call.1} parent=1 // pred_check_branch
      %23 = sbr.rel (0) target = $region9
    $region8: #{tpu_custom_call.1} parent=1 // pred_region
      _
    $region9: #{tpu_custom_call.1} parent=1 // pred_fallthru
      _
    // Predicated region
    $region10: #{tpu_custom_call.1} parent=1 // pred_check
      _
    $region11: #{tpu_custom_call.1} parent=1 // pred_check_branch
      %25 = sbr.rel (0) target = $region13
    $region12: #{tpu_custom_call.1} parent=1 // pred_region
      %27 = vsyncadd [#allocation3], 0
      %s28 = sshll.u32 %s2, 4
      %s29 = int_to_ptr.hbm [resolvable:$true] %s28
      %s30 = sshll.u32 [#allocation2], 4
      %s31 = int_to_ptr.vmem [resolvable:$true] %s30
      %36 = dma.hbm_to_vmem [thread:$0]  %s29, 256, %s31, [#allocation3], 64, 64, 4
    $region13: #{tpu_custom_call.1} parent=1 // pred_fallthru
      _
    // Predicated region
    $region14: #{tpu_custom_call.1} parent=1 // pred_check
      _
    $region15: #{tpu_custom_call.1} parent=1 // pred_check_branch
      %38 = sbr.rel (0) target = $region17
    $region16: #{tpu_custom_call.1} parent=1 // pred_region
      _
    $region17: #{tpu_custom_call.1} parent=1 // pred_fallthru
      _
    // Predicated region
    $region18: #{tpu_custom_call.1} parent=1 // pred_check
      _
    $region19: #{tpu_custom_call.1} parent=1 // pred_check_branch
      %40 = sbr.rel (0) target = $region21
    $region20: #{tpu_custom_call.1} parent=1 // pred_region
      %42 = vsyncadd [#allocation6], 0
      %s43 = sshll.u32 %s4, 4
      %s44 = int_to_ptr.hbm [resolvable:$true] %s43
      %s45 = sshll.u32 [#allocation5], 4
      %s46 = int_to_ptr.vmem [resolvable:$true] %s45
      %51 = dma.hbm_to_vmem [thread:$0]  %s44, 1024, %s46, [#allocation6], 64, 64, 4
    $region21: #{tpu_custom_call.1} parent=1 // pred_fallthru
      _
    // Predicated region
    $region22: #{tpu_custom_call.1} parent=1 // pred_check
      _
    $region23: #{tpu_custom_call.1} parent=1 // pred_check_branch
      %53 = sbr.rel (0) target = $region25
    $region24: #{tpu_custom_call.1} parent=1 // pred_region
      _
    $region25: #{tpu_custom_call.1} parent=1 // pred_fallthru
      _
    // Predicated region
    $region26: #{tpu_custom_call.1} parent=1 // pred_check
      _
    $region27: #{tpu_custom_call.1} parent=1 // pred_check_branch
      %55 = sbr.rel (0) target = $region29
    $region28: #{tpu_custom_call.1} parent=1 // pred_region
      %57 = dma.done [#allocation3], 256
    $region29: #{tpu_custom_call.1} parent=1 // pred_fallthru
      _
    // Predicated region
    $region30: #{tpu_custom_call.1} parent=1 // pred_check
      _
    $region31: #{tpu_custom_call.1} parent=1 // pred_check_branch
      %59 = sbr.rel (0) target = $region33
    $region32: #{tpu_custom_call.1} parent=1 // pred_region
      %61 = dma.done [#allocation6], 1024
    $region33: #{tpu_custom_call.1} parent=1 // pred_fallthru
      _
    %s62 = sadd.s32 0, 0
    %p63 = scmp.lt.s32.totalorder %s62, 0
    %s64 = scalar_select %p63, %s62, 0
    %s65 = smul.addr %s64, 8
    %s66 = scalar_lea.vmem %s0, %s65
    %s67 = sadd.s32 0, 0
    %p68 = scmp.lt.s32.totalorder %s67, 0
    %s69 = scalar_select %p68, %s67, 0
    %s70 = smul.addr %s69, 8
    %s71 = scalar_lea.vmem %s0, %s70
    %s72 = sadd.s32 0, 0
    %p74 = scmp.eq.s32.totalorder 0, 0
    // Predicated region
    $region34: #{tpu_custom_call.1} parent=1 // pred_check
      %p75 = pneg %p74
    $region35: #{tpu_custom_call.1} parent=1 // pred_check_branch
      %77 = sbr.rel (%p75) target = $region37
    $region36: #{tpu_custom_call.1} parent=1 // pred_region
      %78 = vst [vmem:[#allocation7] sm:$0xff] 0.0
    $region37: #{tpu_custom_call.1} parent=1 // pred_fallthru
      _
    %s79 = sadd.s32 0, 0
    %s80 = smul.u32 %s79, 8
    %v81 = vld [vmem:[%s1] sm:$0xff]
    %s82 = sadd.s32 %s80, 0
    %v83 = vld [vmem:[%s71] sm:$0xff]
    %v84 = vlaneseq
    %v85 = vshrl.u32 %v84, 7
    %v86 = vstv %s82
    %v87 = vadd.s32 %v86, %v85
    %vm88 = vcmp.lt.s32.totalorder %v87, 8
    %v89 = vsel %vm88, 1, 0
    %vm90 = vcmp.eq.s32.totalorder %v89, 1
    %v91 = vsel %vm90, %v83, 0.0
    %v92 = vpack.c.bf16 %v91, %v91
    %v93 = vld [vmem:[#allocation2] sm:$0xf]
    %v94 = vld [vmem:[#allocation2 + $0x4] sm:$0xf]
    %v95 = vld [vmem:[#allocation2 + $0x8] sm:$0xf]
    %v96 = vld [vmem:[#allocation2 + $0xc] sm:$0xf]
    %v97 = vld [vmem:[%s3] sm:$0x1]
    %v99 = vperm.slane %v97, 0
    %v105 = vunpack.c.l.b16 %v93
    %v106 = vunpack.c.l.b16 %v94
    %v107 = vunpack.c.l.b16 %v95
    %v108 = vunpack.c.l.b16 %v96
    %v109 = vpack.c.b16 %v106, %v105
    %v110 = vpack.c.b16 %v108, %v107
    %vm113 = vcmask 261120
    %v115 = vsel %vm113, %v92, 0
    %117 = vmatpush.bf16.msra.mxu0 0
    %118 = vmatpush.bf16.msra.mxu0 0
    %119 = vmatpush.bf16.msra.mxu0 0
    %120 = vmatpush.bf16.msra.mxu0 0
    %121 = vmatpush.bf16.msra.mxu0 0
    %122 = vmatpush.bf16.msra.mxu0 0
    %123 = vmatpush.bf16.msra.mxu0 %v110
    %124 = vmatpush.bf16.msra.mxu0 %v109
    %125 = vmatmul.bf16.gmra.mxu0 %v115
    %v126 = vpop.f32.mrf.mxu0
    %v127 = vadd.f32 %v99, %v126
    %v128 = vpop.f32.mrf.mxu0
    %129 = vdwg.mxu0
    %v130 = vmax.f32 %v127, 0.0
    %v131 = vpack.c.bf16 %v130, %v130
    %v132 = vld [vmem:[#allocation5] sm:$0xf]
    %v133 = vld [vmem:[#allocation5 + $0x4] sm:$0xf]
    %v134 = vld [vmem:[#allocation5 + $0x8] sm:$0xf]
    %v135 = vld [vmem:[#allocation5 + $0xc] sm:$0xf]
    %v136 = vld [vmem:[#allocation5 + $0x10] sm:$0xf]
    %v137 = vld [vmem:[#allocation5 + $0x14] sm:$0xf]
    %v138 = vld [vmem:[#allocation5 + $0x18] sm:$0xf]
    %v139 = vld [vmem:[#allocation5 + $0x1c] sm:$0xf]
    %v140 = vld [vmem:[#allocation5 + $0x20] sm:$0xf]
    %v141 = vld [vmem:[#allocation5 + $0x24] sm:$0xf]
    %v142 = vld [vmem:[#allocation5 + $0x28] sm:$0xf]
    %v143 = vld [vmem:[#allocation5 + $0x2c] sm:$0xf]
    %v144 = vld [vmem:[#allocation5 + $0x30] sm:$0xf]
    %v145 = vld [vmem:[#allocation5 + $0x34] sm:$0xf]
    %v146 = vld [vmem:[#allocation5 + $0x38] sm:$0xf]
    %v147 = vld [vmem:[#allocation5 + $0x3c] sm:$0xf]
    %v148 = vld [vmem:[%s5] sm:$0x1]
    %v150 = vperm.slane %v148, 0
    %v168 = vunpack.c.l.b16 %v132
    %v169 = vunpack.c.l.b16 %v133
    %v170 = vunpack.c.l.b16 %v134
    %v171 = vunpack.c.l.b16 %v135
    %v172 = vunpack.c.l.b16 %v136
    %v173 = vunpack.c.l.b16 %v137
    %v174 = vunpack.c.l.b16 %v138
    %v175 = vunpack.c.l.b16 %v139
    %v176 = vunpack.c.l.b16 %v140
    %v177 = vunpack.c.l.b16 %v141
    %v178 = vunpack.c.l.b16 %v142
    %v179 = vunpack.c.l.b16 %v143
    %v180 = vunpack.c.l.b16 %v144
    %v181 = vunpack.c.l.b16 %v145
    %v182 = vunpack.c.l.b16 %v146
    %v183 = vunpack.c.l.b16 %v147
    %v184 = vpack.c.b16 %v169, %v168
    %v185 = vpack.c.b16 %v171, %v170
    %v186 = vpack.c.b16 %v173, %v172
    %v187 = vpack.c.b16 %v175, %v174
    %v188 = vpack.c.b16 %v177, %v176
    %v189 = vpack.c.b16 %v179, %v178
    %v190 = vpack.c.b16 %v181, %v180
    %v191 = vpack.c.b16 %v183, %v182
    %200 = vmatpush.bf16.msra.mxu0 %v191
    %201 = vmatpush.bf16.msra.mxu0 %v190
    %202 = vmatpush.bf16.msra.mxu0 %v189
    %203 = vmatpush.bf16.msra.mxu0 %v188
    %204 = vmatpush.bf16.msra.mxu0 %v187
    %205 = vmatpush.bf16.msra.mxu0 %v186
    %206 = vmatpush.bf16.msra.mxu0 %v185
    %207 = vmatpush.bf16.msra.mxu0 %v184
    %208 = vmatmul.bf16.gmra.mxu0 %v131
    %v209 = vpop.f32.mrf.mxu0
    %v210 = vadd.f32 %v150, %v209
    %v211 = vpop.f32.mrf.mxu0
    %212 = vdwg.mxu0
    %v213 = vlaneseq
    %v214 = vand.u32 %v213, 127
    %v215 = vadd.s32 %v86, %v214
    %216 = vset.pattern.permute.xlu0 0
    %217 = vperm.xlu0 %216, %v81
    %v218 = vpop.permute.xlu0 %217
    %vm219 = vcmp.ge.s32.totalorder %v215, %v218
    %220 = vset.pattern.permute.xlu0 1
    %221 = vperm.xlu0 %220, %v81
    %v222 = vpop.permute.xlu0 %221
    %vm223 = vcmp.lt.s32.totalorder %v215, %v222
    %vm224 = vmand %vm219, %vm223
    %v225 = vsel %vm224, 1, 0
    %v226 = vcvt.s32.f32 %v225
    %v227 = vld [vmem:[#allocation7] sm:$0xff]
    %vm228 = vcmask 64512
    %v230 = vsel %vm228, %v226, 0
    %232 = vmatpush.msra.mxu0 0.0
    %233 = vmatpush.msra.mxu0 0.0
    %234 = vmatpush.msra.mxu0 0.0
    %235 = vmatpush.msra.mxu0 0.0
    %236 = vmatpush.msra.mxu0 0.0
    %237 = vmatpush.msra.mxu0 0.0
    %238 = vmatpush.msra.mxu0 0.0
    %239 = vmatpush.msra.mxu0 0.0
    %240 = vmatpush.msra.mxu0 0.0
    %241 = vmatpush.msra.mxu0 0.0
    %242 = vmatpush.msra.mxu0 0.0
    %243 = vmatpush.msra.mxu0 0.0
    %244 = vmatpush.msra.mxu0 0.0
    %245 = vmatpush.msra.mxu0 0.0
    %246 = vmatpush.msra.mxu0 0.0
    %247 = vmatpush.msra.mxu0 %v210
    %248 = vmatmul.f32.gmra.mxu0 %v230
    %v249 = vpop.f32.mrf.mxu0
    %v250 = vadd.f32 0.0, %v249
    %251 = vdwg.mxu0
    %v252 = vadd.f32 %v227, %v250
    %253 = vst [vmem:[#allocation7] sm:$0xff] %v252
    // Predicated region
    $region38: #{tpu_custom_call.1} parent=1 // pred_check
      _
    $region39: #{tpu_custom_call.1} parent=1 // pred_check_branch
      %255 = sbr.rel (0) target = $region41
    $region40: #{tpu_custom_call.1} parent=1 // pred_region
      %257 = vsyncadd [#allocation4], 0
      %s259 = sshll.u32 [#allocation7], 4
      %s260 = int_to_ptr.vmem [resolvable:$true] %s259
      %s261 = sshll.u32 %s6, 4
      %s262 = int_to_ptr.hbm [resolvable:$true] %s261
      %264 = dma.vmem_to_hbm [thread:$0]  %s260, 128, %s262, [#allocation4]
    $region41: #{tpu_custom_call.1} parent=1 // pred_fallthru
      _
    // Predicated region
    $region42: #{tpu_custom_call.1} parent=1 // pred_check
      _
    $region43: #{tpu_custom_call.1} parent=1 // pred_check_branch
      %266 = sbr.rel (0) target = $region45
    $region44: #{tpu_custom_call.1} parent=1 // pred_region
      %268 = dma.done [#allocation4], 128
    $region45: #{tpu_custom_call.1} parent=1 // pred_fallthru
      _
    %269 = vsyncpa [#allocation3], 1
    %270 = vsyncpa [#allocation6], 1
    %271 = vsyncpa [#allocation4], 1

</llo_original>
